<compile_context>
chip_gen: v5e
topology: v5e:2x2
jax: 0.10.0
libtpu: 0.0.40
codegen_flags: <defaults>
</compile_context>

<pallas_src>
import jax
import jax.numpy as jnp
from jax.experimental import pallas as pl
from jax.experimental.pallas import tpu as pltpu


def _round_up(x: int, m: int) -> int:
    return (x + m - 1) // m * m


def _critic_kernel(x_ref, w1_ref, b1_ref, w2_ref, b2_ref, o_ref):
    """One batch tile of the fused Critic forward.

    x_ref  : (TB, F)   activation tile (feature dim un-padded)
    w1_ref : (F, Hp)   layer-1 weight, bf16, hidden padded to a multiple of 8
    b1_ref : (1, Hp)   layer-1 bias row (f32, zero in padded columns)
    w2_ref : (Hp, 1)   layer-2 weight column (f32, zero in padded rows)
    b2_ref : (1,)      layer-2 bias, SMEM scalar
    o_ref  : (TB, 1)   output tile
    """
    # Layer 1 on the MXU: cast the streamed tile to bf16 in-kernel (native MXU
    # dtype on v6e/v7x, fine on v5e), accumulate in f32.  Canonical orientation
    # (contraction = lhs last dim x rhs first dim) -> no transpose of x.
    x = x_ref[...].astype(jnp.bfloat16)
    h = jnp.dot(x, w1_ref[...], preferred_element_type=jnp.float32)     # (TB, Hp)
    # Bias + ReLU6 on the VPU in f32 (v5e has no bf16 VALU).  Padded hidden
    # columns: bias 0 -> relu6(0) = 0, and w2's padded rows are 0 below.
    h = jnp.clip(h + b1_ref[...], 0.0, 6.0)
    # Layer 2 (output width 1) on the otherwise-idle MXU; a cross-lane VPU/XLU
    # reduce here would become the binding slot once x padding waste is gone.
    v = jnp.dot(h, w2_ref[...], preferred_element_type=jnp.float32)     # (TB, 1)
    o_ref[...] = v + b2_ref[0]


def prepare_critic_params(w1, b1, w2, b2):
    """One-time prep (outside the per-call hot path).

    w1: (n_features, 100), b1: (100,), w2: (100, 1), b2: (1,)
    Hidden dim is padded to a multiple of 8 only; feature dim stays un-padded.
    """
    F, H = w1.shape
    Hp = _round_up(H, 8)
    w1p = jnp.pad(jnp.asarray(w1, jnp.float32),
                  ((0, 0), (0, Hp - H))).astype(jnp.bfloat16)            # (F, Hp)
    b1p = jnp.pad(jnp.asarray(b1, jnp.float32), (0, Hp - H)).reshape(1, Hp)
    w2p = jnp.pad(jnp.asarray(w2, jnp.float32), ((0, Hp - H), (0, 0)))   # (Hp, 1)
    b2p = jnp.asarray(b2, jnp.float32).reshape(1)                        # SMEM scalar
    return w1p, b1p, w2p, b2p


def _choose_tb(B: int, F: int, Hp: int) -> int:
    """Batch-tile size from a VMEM budget (lane-padded tile layouts)."""
    lanes_x = _round_up(F, 128)      # VMEM footprint of an (TB, F) f32 block
    lanes_h = _round_up(Hp, 128)     # (TB, Hp) intermediates live lane-padded
    # 2x double-buffered x block + ~3x f32 intermediates + 2x (TB, 1) out block.
    bytes_per_row = 4 * (2 * lanes_x + 3 * lanes_h + 2 * 128)
    budget = 16 * 1024 * 1024        # comfortably under the 32 MiB scoped limit
    tb = max(8, (budget // bytes_per_row) // 8 * 8)
    tb = min(tb, 4096)               # per-step overhead (~0.35us) already <<1%
    if B >= 512:
        # Keep >= 4 grid steps so ("parallel",) can shard batch tiles across
        # both TensorCores on v7x and the pipeline has work to overlap.
        tb = min(tb, max(128, _round_up((B + 3) // 4, 8)))
    return max(8, min(tb, _round_up(B, 8)))


@jax.jit
def critic_forward(x, w1, b1, w2, b2):
    """Fused Critic forward: relu6(x @ w1 + b1) @ w2 + b2.  x:(B,F) -> (B,1) f32."""
    B, F = x.shape
    Fw, Hp = w1.shape
    assert Fw == F, "w1 must be prepared with prepare_critic_params"

    TB = _choose_tb(B, F, Hp)
    grid = (pl.cdiv(B, TB),)   # last block may be partial; OOB rows are masked

    flops = 2 * B * F * Hp + 2 * B * Hp + 3 * B * Hp
    bytes_accessed = 4 * B * F + 2 * F * Hp + 4 * Hp + 4 * Hp + 4 + 4 * B

    return pl.pallas_call(
        _critic_kernel,
        out_shape=jax.ShapeDtypeStruct((B, 1), jnp.float32),
        grid=grid,
        in_specs=[
            pl.BlockSpec((TB, F), lambda i: (i, 0)),     # x streams, F un-padded
            pl.BlockSpec((F, Hp), lambda i: (0, 0)),     # weights stay VMEM-resident
            pl.BlockSpec((1, Hp), lambda i: (0, 0)),
            pl.BlockSpec((Hp, 1), lambda i: (0, 0)),
            pl.BlockSpec(memory_space=pltpu.MemorySpace.SMEM),   # b2 scalar
        ],
        out_specs=pl.BlockSpec((TB, 1), lambda i: (i, 0)),
        compiler_params=pltpu.CompilerParams(
            dimension_semantics=("parallel",),
            vmem_limit_bytes=32 * 1024 * 1024),
        cost_estimate=pl.CostEstimate(
            flops=flops, transcendentals=0, bytes_accessed=bytes_accessed),
    )(x, w1, b1, w2, b2)


def init_critic_params(key, n_features, hidden=100):
    """Mirrors torch.nn.Linear default init (U[-1/sqrt(fan_in), 1/sqrt(fan_in)])."""
    k1, k2, k3, k4 = jax.random.split(key, 4)
    bound1 = 1.0 / jnp.sqrt(jnp.float32(n_features))
    bound2 = 1.0 / jnp.sqrt(jnp.float32(hidden))
    w1 = jax.random.uniform(k1, (n_features, hidden), jnp.float32, -bound1, bound1)
    b1 = jax.random.uniform(k2, (hidden,), jnp.float32, -bound1, bound1)
    w2 = jax.random.uniform(k3, (hidden, 1), jnp.float32, -bound2, bound2)
    b2 = jax.random.uniform(k4, (1,), jnp.float32, -bound2, bound2)
    return w1, b1, w2, b2


if __name__ == "__main__":
    key = jax.random.PRNGKey(0)
    k_x, k_p = jax.random.split(key)

    batch = 2
    n_features = 32

    x = jax.random.normal(k_x, (batch, n_features), jnp.float32)
    w1, b1, w2, b2 = init_critic_params(k_p, n_features)

    # Pad/transpose weights once, outside the hot path.
    params = prepare_critic_params(w1, b1, w2, b2)

    v = critic_forward(x, *params)
    v = jax.block_until_ready(v)

    # Reference in plain JAX (same math as the PyTorch module), f32.  The kernel
    # uses bf16 MXU operands with f32 accumulation, so tolerance is relaxed.
    h_ref = jnp.clip(x @ w1 + b1, 0.0, 6.0)
    v_ref = h_ref @ w2 + b2
    assert v.shape == (batch, 1)
    assert jnp.allclose(v, v_ref, atol=5e-2, rtol=5e-2)

    print("KERNEL_OK")
</pallas_src>

<mosaic_0001>
module attributes {stable_mosaic.version = 11 : i64} {
  func.func @_critic_kernel(%arg0: i32, %arg1: memref<8x32xf32, #tpu.memory_space<vmem>>, %arg2: memref<32x104xbf16, #tpu.memory_space<vmem>>, %arg3: memref<1x104xf32, #tpu.memory_space<vmem>>, %arg4: memref<104x1xf32, #tpu.memory_space<vmem>>, %arg5: memref<1xf32, #tpu.memory_space<smem>>, %arg6: memref<8x1xf32, #tpu.memory_space<vmem>>) attributes {dimension_semantics = [#tpu.dimension_semantics<parallel>], iteration_bounds = array<i64: 1>, scalar_prefetch = 0 : i64, scratch_operands = 0 : i64, tpu.core_type = #tpu.core_type<tc>, window_params = [{transform_indices = @transform_0, window_bounds = array<i64: 8, 32>}, {pipeline_mode = #tpu.pipeline_mode<synchronous>, transform_indices = @transform_1, window_bounds = array<i64: 32, 104>}, {pipeline_mode = #tpu.pipeline_mode<synchronous>, transform_indices = @transform_2, window_bounds = array<i64: 1, 104>}, {pipeline_mode = #tpu.pipeline_mode<synchronous>, transform_indices = @transform_3, window_bounds = array<i64: 104, 1>}, {transform_indices = @transform_4, window_bounds = array<i64: 1>}, {transform_indices = @transform_5, window_bounds = array<i64: 8, 1>}]} {
    %c0 = arith.constant 0 : index
    %c0_0 = arith.constant 0 : index
    %0 = vector.load %arg1[%c0, %c0_0] : memref<8x32xf32, #tpu.memory_space<vmem>>, vector<8x32xf32>
    %1 = arith.truncf %0 : vector<8x32xf32> to vector<8x32xbf16>
    %c0_1 = arith.constant 0 : index
    %c0_2 = arith.constant 0 : index
    %2 = vector.load %arg2[%c0_1, %c0_2] : memref<32x104xbf16, #tpu.memory_space<vmem>>, vector<32x104xbf16>
    %cst = arith.constant dense<0.000000e+00> : vector<8x104xf32>
    %3 = tpu.matmul %1, %2, %cst {dimension_numbers = #tpu.dot_dimension_numbers<[1], [0], [0], [1], [0, 0, 1, 1], [], []>} : vector<8x32xbf16>, vector<32x104xbf16>, vector<8x104xf32> -> vector<8x104xf32>
    %c0_3 = arith.constant 0 : index
    %c0_4 = arith.constant 0 : index
    %4 = vector.load %arg3[%c0_3, %c0_4] : memref<1x104xf32, #tpu.memory_space<vmem>>, vector<1x104xf32>
    %5 = vector.broadcast %4 : vector<1x104xf32> to vector<8x104xf32>
    %6 = arith.addf %3, %5 : vector<8x104xf32>
    %cst_5 = arith.constant 0.000000e+00 : f32
    %cst_6 = arith.constant 6.000000e+00 : f32
    %7 = vector.broadcast %cst_5 : f32 to vector<8x104xf32>
    %8 = arith.maximumf %7, %6 : vector<8x104xf32>
    %9 = vector.broadcast %cst_6 : f32 to vector<8x104xf32>
    %10 = arith.minimumf %9, %8 : vector<8x104xf32>
    %c0_7 = arith.constant 0 : index
    %c0_8 = arith.constant 0 : index
    %11 = vector.load %arg4[%c0_7, %c0_8] : memref<104x1xf32, #tpu.memory_space<vmem>>, vector<104x1xf32>
    %cst_9 = arith.constant dense<0.000000e+00> : vector<8x1xf32>
    %12 = tpu.matmul %10, %11, %cst_9 {dimension_numbers = #tpu.dot_dimension_numbers<[1], [0], [0], [1], [0, 0, 1, 1], [], []>} : vector<8x104xf32>, vector<104x1xf32>, vector<8x1xf32> -> vector<8x1xf32>
    %c0_10 = arith.constant 0 : index
    %13 = memref.load %arg5[%c0_10] : memref<1xf32, #tpu.memory_space<smem>>
    %14 = vector.broadcast %13 : f32 to vector<8x1xf32>
    %15 = arith.addf %12, %14 : vector<8x1xf32>
    %c0_11 = arith.constant 0 : index
    %c0_12 = arith.constant 0 : index
    %16 = vector.load %arg6[%c0_11, %c0_12] : memref<8x1xf32, #tpu.memory_space<vmem>>, vector<8x1xf32>
    tpu.vector_store %arg6[%c0_11, %c0_12], %15 {strides = array<i32>} : memref<8x1xf32, #tpu.memory_space<vmem>>, vector<8x1xf32>,
    return
  }
  func.func @transform_0(%arg0: i32) -> (i32, i32) {
    %c0_i32 = arith.constant 0 : i32
    %c0_i32_0 = arith.constant 0 : i32
    return %arg0, %c0_i32 : i32, i32
  }
  func.func @transform_1(%arg0: i32) -> (i32, i32) {
    %c0_i32 = arith.constant 0 : i32
    %c0_i32_0 = arith.constant 0 : i32
    %c0_i32_1 = arith.constant 0 : i32
    return %c0_i32, %c0_i32_0 : i32, i32
  }
  func.func @transform_2(%arg0: i32) -> (i32, i32) {
    %c0_i32 = arith.constant 0 : i32
    %c0_i32_0 = arith.constant 0 : i32
    %c0_i32_1 = arith.constant 0 : i32
    return %c0_i32, %c0_i32_0 : i32, i32
  }
  func.func @transform_3(%arg0: i32) -> (i32, i32) {
    %c0_i32 = arith.constant 0 : i32
    %c0_i32_0 = arith.constant 0 : i32
    %c0_i32_1 = arith.constant 0 : i32
    return %c0_i32, %c0_i32_0 : i32, i32
  }
  func.func @transform_4(%arg0: i32) -> i32 {
    %c0_i32 = arith.constant 0 : i32
    %c0_i32_0 = arith.constant 0 : i32
    return %c0_i32 : i32
  }
  func.func @transform_5(%arg0: i32) -> (i32, i32) {
    %c0_i32 = arith.constant 0 : i32
    %c0_i32_0 = arith.constant 0 : i32
    return %arg0, %c0_i32 : i32, i32
  }
}

</mosaic_0001>

<llo_original>
// kernel: critic_forward.1
$region0: #{critic_forward.1}
  #allocation0 [shape = 'u32[]', space=smem, size = 0x4, offset = 0x4, fixed_abs, tag = 'smem constant byte address 0x4 - core index']
  #allocation1 [shape = 'u32[72,128]{1,0:T(1,128)}', space=vmem, size = 0x9000, scoped, tag = 'internal scratch']
  #allocation2 [shape = 'f32[1]{0:T(128)S(6)}', space=smem, size = 0x200, scoped, tag = 'scoped memory for critic_forward.1']
  %s0 = inlined_call_operand.vmem [shape: f32[2,32], index: 0, kind: input, shape index: {}]
  %s1 = inlined_call_operand.vmem [shape: bf16[32,104], index: 1, kind: input, shape index: {}]
  %s2 = inlined_call_operand.vmem [shape: f32[1,104], index: 2, kind: input, shape index: {}]
  %s3 = inlined_call_operand.vmem [shape: f32[104,1], index: 3, kind: input, shape index: {}]
  %s4 = inlined_call_operand.<no memory space> [shape: f32[1], index: 4, kind: input, shape index: {}]
  %s5 = inlined_call_operand.vmem [shape: f32[2,1], index: 5, kind: output, shape index: {}]
  %s6 = sld [smem:[#allocation0]]
  $region60: #{critic_forward.1} parent=0
    _
  %s8 = ssub.s32 1, %s6
  %s9 = scalar_select 0, %s8, %s6
  %10 = sst [smem:[#allocation2]] %s4
  $region1: #{critic_forward.1} parent=0
    #allocation3 [shape = 'u8[4096]{0}', space=vmem, size = 0x1000, scoped, tag = 'output window, operand 0, single buffered']
    // Predicated region
    $region2: #{critic_forward.1} parent=1 // pred_check
      _
    $region3: #{critic_forward.1} parent=1 // pred_check_branch
      %12 = sbr.rel (0) target = $region5
    $region4: #{critic_forward.1} parent=1 // pred_region
      _
    $region5: #{critic_forward.1} parent=1 // pred_fallthru
      _
    // Predicated region
    $region6: #{critic_forward.1} parent=1 // pred_check
      _
    $region7: #{critic_forward.1} parent=1 // pred_check_branch
      %14 = sbr.rel (0) target = $region9
    $region8: #{critic_forward.1} parent=1 // pred_region
      _
    $region9: #{critic_forward.1} parent=1 // pred_fallthru
      _
    // Predicated region
    $region10: #{critic_forward.1} parent=1 // pred_check
      _
    $region11: #{critic_forward.1} parent=1 // pred_check_branch
      %16 = sbr.rel (0) target = $region13
    $region12: #{critic_forward.1} parent=1 // pred_region
      _
    $region13: #{critic_forward.1} parent=1 // pred_fallthru
      _
    // Predicated region
    $region14: #{critic_forward.1} parent=1 // pred_check
      _
    $region15: #{critic_forward.1} parent=1 // pred_check_branch
      %18 = sbr.rel (0) target = $region17
    $region16: #{critic_forward.1} parent=1 // pred_region
      _
    $region17: #{critic_forward.1} parent=1 // pred_fallthru
      _
    // Predicated region
    $region18: #{critic_forward.1} parent=1 // pred_check
      _
    $region19: #{critic_forward.1} parent=1 // pred_check_branch
      %20 = sbr.rel (0) target = $region21
    $region20: #{critic_forward.1} parent=1 // pred_region
      _
    $region21: #{critic_forward.1} parent=1 // pred_fallthru
      _
    %v22 = vld [vmem:[%s0] sm:$0xff]
    %v23 = vpack.c.bf16 %v22, %v22
    %v24 = vld [vmem:[%s1] sm:$0xf]
    %v25 = vld [vmem:[%s1 + $0x4] sm:$0xf]
    %v26 = vld [vmem:[%s1 + $0x8] sm:$0xf]
    %v27 = vld [vmem:[%s1 + $0xc] sm:$0xf]
    %v28 = vld [vmem:[%s2] sm:$0x1]
    %v30 = vperm.slane %v28, 0
    %v36 = vunpack.c.l.b16 %v24
    %v37 = vunpack.c.l.b16 %v25
    %v38 = vunpack.c.l.b16 %v26
    %v39 = vunpack.c.l.b16 %v27
    %v40 = vpack.c.b16 %v37, %v36
    %v41 = vpack.c.b16 %v39, %v38
    %vm44 = vcmask 261120
    %v46 = vsel %vm44, %v23, 0
    %48 = vmatpush.bf16.msra.mxu0 0
    %49 = vmatpush.bf16.msra.mxu0 0
    %50 = vmatpush.bf16.msra.mxu0 0
    %51 = vmatpush.bf16.msra.mxu0 0
    %52 = vmatpush.bf16.msra.mxu0 0
    %53 = vmatpush.bf16.msra.mxu0 0
    %54 = vmatpush.bf16.msra.mxu0 %v41
    %55 = vmatpush.bf16.msra.mxu0 %v40
    %56 = vmatmul.bf16.gmra.mxu0 %v46
    %v57 = vpop.f32.mrf.mxu0
    %v58 = vadd.f32 %v30, %v57
    %v59 = vpop.f32.mrf.mxu0
    %60 = vdwg.mxu0
    %v61 = vmax.f32 %v58, 0.0
    %v62 = vmin.f32 %v61, 6.0
    %v63 = vld [vmem:[%s3] sm:$0xff]
    %v64 = vld [vmem:[%s3 + $0x8] sm:$0xff]
    %v65 = vld [vmem:[%s3 + $0x10] sm:$0xff]
    %v66 = vld [vmem:[%s3 + $0x18] sm:$0xff]
    %v67 = vld [vmem:[%s3 + $0x20] sm:$0xff]
    %v68 = vld [vmem:[%s3 + $0x28] sm:$0xff]
    %v69 = vld [vmem:[%s3 + $0x30] sm:$0xff]
    %v70 = vld [vmem:[%s3 + $0x38] sm:$0xff]
    %v71 = vld [vmem:[%s3 + $0x40] sm:$0xff]
    %v72 = vld [vmem:[%s3 + $0x48] sm:$0xff]
    %v73 = vld [vmem:[%s3 + $0x50] sm:$0xff]
    %v74 = vld [vmem:[%s3 + $0x58] sm:$0xff]
    %v75 = vld [vmem:[%s3 + $0x60] sm:$0xff]
    %s76 = sld [smem:[#allocation2]]
    %v77 = vstv %s76
    %vm78 = vcmask 850944
    %v80 = vsel %vm78, %v62, 0
    %82 = vmatpush.msra.mxu0 0.0
    %83 = vmatpush.msra.mxu0 0.0
    %84 = vmatpush.msra.mxu0 0.0
    %85 = vmatpush.msra.mxu0 %v75
    %86 = vmatpush.msra.mxu0 %v74
    %87 = vmatpush.msra.mxu0 %v73
    %88 = vmatpush.msra.mxu0 %v72
    %89 = vmatpush.msra.mxu0 %v71
    %90 = vmatpush.msra.mxu0 %v70
    %91 = vmatpush.msra.mxu0 %v69
    %92 = vmatpush.msra.mxu0 %v68
    %93 = vmatpush.msra.mxu0 %v67
    %94 = vmatpush.msra.mxu0 %v66
    %95 = vmatpush.msra.mxu0 %v65
    %96 = vmatpush.msra.mxu0 %v64
    %97 = vmatpush.msra.mxu0 %v63
    %98 = vmatmul.f32.gmra.mxu0 %v80
    %v99 = vpop.f32.mrf.mxu0
    %v100 = vadd.f32 %v77, %v99
    %101 = vdwg.mxu0
    %vm102 = vcmask 7168
    %103 = vst.msk [vmem:[#allocation3] sm:$0xff] %vm102, %v100
    // Predicated region
    $region22: #{critic_forward.1} parent=1 // pred_check
      _
    $region23: #{critic_forward.1} parent=1 // pred_check_branch
      %105 = sbr.rel (0) target = $region25
    $region24: #{critic_forward.1} parent=1 // pred_region
      // Predicated region
      $region26: #{critic_forward.1} parent=24 // pred_check
        _
      $region27: #{critic_forward.1} parent=24 // pred_check_branch
        %107 = sbr.rel (0) target = $region29
      $region28: #{critic_forward.1} parent=24 // pred_region
        // Predicated region
        $region30: #{critic_forward.1} parent=28 // pred_check
          _
        $region31: #{critic_forward.1} parent=28 // pred_check_branch
          %109 = sbr.rel target = $region33
        $region32: #{critic_forward.1} parent=28 // pred_region
          // Predicated region
          $region45: #{critic_forward.1} parent=32 // pred_check
            _
          $region46: #{critic_forward.1} parent=32 // pred_check_branch
            %125 = sbr.rel (0) target = $region48
          $region47: #{critic_forward.1} parent=32 // pred_region
            %s127 = ssub.s32 4, 1
            loop: start=0, step=1, limit=1
            $region49: #{critic_forward.1} parent=47 // loop_pre_header
              _
            $region50: #{critic_forward.1} parent=47 // loop_header
              %s129 = sphi 0, %s133
              %p130 = scmp.ge.s32.totalorder %s129, 1
              %s134 = sphi [#allocation3], [#allocation3]
              %s135 = sphi %s5, %s5
            $region51: #{critic_forward.1} parent=47 // loop_header_branch
              %132 = sbr.rel (%p130) target = $region55
            $region52: #{critic_forward.1} parent=47 // loop_body
              %v136 = vld [vmem:[%s134] sm:%s127]
              %137 = vst [vmem:[%s135] sm:%s127] %v136
            $region53: #{critic_forward.1} parent=47 // loop_footer
              %s133 = sadd.s32 1, %s129
            $region54: #{critic_forward.1} parent=47 // loop_footer_branch
              %128 = sbr.rel target = $region50
            $region55: #{critic_forward.1} parent=47 // loop_exit
              _
          $region48: #{critic_forward.1} parent=32 // pred_fallthru
            _
        $region33: #{critic_forward.1} parent=28 // pred_fallthru
          _
        // Predicated region
        $region34: #{critic_forward.1} parent=28 // pred_check
          _
        $region35: #{critic_forward.1} parent=28 // pred_check_branch
          %111 = sbr.rel (0) target = $region37
        $region36: #{critic_forward.1} parent=28 // pred_region
          %s113 = ssub.s32 4, 1
          loop: start=0, step=1, limit=1
          $region38: #{critic_forward.1} parent=36 // loop_pre_header
            _
          $region39: #{critic_forward.1} parent=36 // loop_header
            %s115 = sphi 0, %s119
            %p116 = scmp.ge.s32.totalorder %s115, 1
            %s120 = sphi [#allocation3], [#allocation3]
            %s121 = sphi %s5, %s5
          $region40: #{critic_forward.1} parent=36 // loop_header_branch
            %118 = sbr.rel (%p116) target = $region44
          $region41: #{critic_forward.1} parent=36 // loop_body
            %v122 = vld [vmem:[%s120] sm:%s113]
            %123 = vst [vmem:[%s121] sm:%s113] %v122
          $region42: #{critic_forward.1} parent=36 // loop_footer
            %s119 = sadd.s32 1, %s115
          $region43: #{critic_forward.1} parent=36 // loop_footer_branch
            %114 = sbr.rel target = $region39
          $region44: #{critic_forward.1} parent=36 // loop_exit
            _
        $region37: #{critic_forward.1} parent=28 // pred_fallthru
          _
      $region29: #{critic_forward.1} parent=24 // pred_fallthru
        _
      %138 = vnop
    $region25: #{critic_forward.1} parent=1 // pred_fallthru
      _
    // Predicated region
    $region56: #{critic_forward.1} parent=1 // pred_check
      _
    $region57: #{critic_forward.1} parent=1 // pred_check_branch
      %140 = sbr.rel (0) target = $region59
    $region58: #{critic_forward.1} parent=1 // pred_region
      _
    $region59: #{critic_forward.1} parent=1 // pred_fallthru
      _

</llo_original>
